<compile_context>
chip_gen: v5e
topology: v5e:2x2
jax: 0.10.0
libtpu: 0.0.40
codegen_flags: <defaults>
</compile_context>

<pallas_src>
import functools

import jax
import jax.numpy as jnp
from jax import lax
from jax.experimental import pallas as pl
from jax.experimental.pallas import tpu as pltpu


_NEG_BIG = -1e30  # "-inf" sentinel that still exp()s to exactly 0.0


def _round_up(x, m):
    return ((x + m - 1) // m) * m


def _nt_xent_kernel(zr_ref, zc_ref, out_ref, m_sc, l_sc, pos_sc, *,
                    b, b_pad, inv_temp):
    tm = zr_ref.shape[0]
    tk = zc_ref.shape[0]
    i = pl.program_id(0)            # row-tile index   ("parallel")
    k = pl.program_id(1)            # column-tile index ("arbitrary", innermost)
    row_start = i * tm
    col_start = k * tk

    @pl.when(k == 0)
    def _init():
        m_sc[...] = jnp.full(m_sc.shape, _NEG_BIG, dtype=jnp.float32)
        l_sc[...] = jnp.zeros(l_sc.shape, dtype=jnp.float32)

    # Inputs were L2-normalized in the wrapper; fold 1/T into the (small) row
    # operand so the MXU output is already sim = cos(z_i, z_j) / T.
    q = zr_ref[...] * inv_temp                      # (tm, D), compute dtype
    zc = zc_ref[...]                                # (tk, D)
    s = lax.dot_general(q, zc, dimension_numbers=(((1,), (1,)), ((), ())),
                        preferred_element_type=jnp.float32)   # (tm, tk) f32

    # ---- positive logit ------------------------------------------------
    # pair(row) = row +/- b_pad; the whole pair-column block of this row tile
    # lives in exactly one column tile (tm | tk | n_pad), so extract it with a
    # masked row-reduce the one time we see it.  Pair columns of valid rows
    # are never self-columns nor padding, so the raw sim tile is correct here.
    pair_start = jnp.where(row_start >= b_pad, row_start - b_pad,
                           row_start + b_pad)

    @pl.when((col_start <= pair_start) & (pair_start < col_start + tk))
    def _positive():
        delta = pair_start - col_start              # local column of row 0's pair
        rloc = lax.broadcasted_iota(jnp.int32, (tm, tk), 0)
        cloc = lax.broadcasted_iota(jnp.int32, (tm, tk), 1)
        pos_sc[...] = jnp.sum(jnp.where(cloc - rloc == delta, s, 0.0),
                              axis=-1, keepdims=True)

    # ---- online (flash-style) logsumexp ---------------------------------
    # Safe with the -1e30 sentinel because every valid row always has at least
    # one unmasked column (its positive pair): a temporarily all-masked block
    # only adds exp(0) terms to l, which are rescaled to 0 by alpha as soon as
    # a real maximum shows up.
    def _accumulate(x):
        m_prev = m_sc[...]
        m_new = jnp.maximum(m_prev, jnp.max(x, axis=-1, keepdims=True))
        alpha = jnp.exp(m_prev - m_new)
        # TODO(synk): on v6e/v7x, exp((x - m_new).astype(bf16)) roughly doubles
        # EUP throughput if the exp slot ever binds (small D); kept f32 here.
        l_sc[...] = alpha * l_sc[...] + jnp.sum(jnp.exp(x - m_new),
                                                axis=-1, keepdims=True)
        m_sc[...] = m_new

    # Only blocks touching the diagonal or the zero-padded columns pay for the
    # O(tm*tk) mask build; every other block takes the cheap path.
    has_diag = (row_start < col_start + tk) & (col_start < row_start + tm)
    if b_pad != b:
        has_pad = (((col_start < b_pad) & (col_start + tk > b))
                   | (col_start + tk > b_pad + b))
        needs_mask = has_diag | has_pad
    else:
        needs_mask = has_diag

    @pl.when(needs_mask)
    def _masked_update():
        rid = row_start + lax.broadcasted_iota(jnp.int32, (tm, tk), 0)
        cid = col_start + lax.broadcasted_iota(jnp.int32, (tm, tk), 1)
        sm = jnp.where(rid == cid, _NEG_BIG, s)          # drop self-similarity
        if b_pad != b:                                   # drop padded columns
            valid = (cid < b) | ((cid >= b_pad) & (cid < b_pad + b))
            sm = jnp.where(valid, sm, _NEG_BIG)
        _accumulate(sm)

    @pl.when(jnp.logical_not(needs_mask))
    def _plain_update():
        _accumulate(s)

    @pl.when(k == pl.num_programs(1) - 1)
    def _finalize():
        # NOTE: (tm, 1) output block -> one masked store per row tile; kept
        # (instead of a lane-major layout) so tiny tiles stay within Mosaic's
        # block-shape constraints.
        out_ref[...] = m_sc[...] + jnp.log(l_sc[...]) - pos_sc[...]


def nt_xent_loss(z, batch_size, temperature, *, tm=512, tk=1024,
                 compute_dtype=jnp.bfloat16, col_buffers=None):
    """NT-Xent forward loss. compute_dtype=bf16 feeds the MXU at full rate."""
    N, D = z.shape
    assert N == 2 * batch_size, "z must have shape (2 * batch_size, hidden_dim)"
    compute_dtype = jnp.dtype(compute_dtype)

    # ---- tile / padding bookkeeping (all static Python ints) ----
    row_align = 8 * (4 // compute_dtype.itemsize)     # 8 for f32, 16 for bf16
    tm_eff = min(tm, _round_up(batch_size, row_align))
    tm_eff = max(row_align, (tm_eff // row_align) * row_align)
    b_pad = _round_up(batch_size, tm_eff)             # each half padded to tm_eff
    n_pad = 2 * b_pad
    nblk_rows = n_pad // tm_eff                       # always >= 2 (v7x: 2 TCs busy)
    # column tile = multiple of tm_eff that divides n_pad and is <= tk
    want = max(1, tk // tm_eff)
    mult = 1
    for d in range(1, nblk_rows + 1):
        if nblk_rows % d == 0 and d <= want:
            mult = d
    tk_eff = tm_eff * mult
    nblk_cols = n_pad // tk_eff

    # ---- one fused XLA pass: L2-normalize (optionally cast to bf16) ----
    z32 = z.astype(jnp.float32)
    z_hat = z32 * lax.rsqrt(
        jnp.maximum(jnp.sum(z32 * z32, axis=-1, keepdims=True), 1e-16))
    z_hat = z_hat.astype(compute_dtype)

    # Pad each half separately so pair(i) = i +/- b_pad stays tile aligned
    # (pure layout plumbing; zero rows/cols are masked in-kernel).
    if b_pad == batch_size:
        zp = z_hat
    else:
        zp = jnp.zeros((n_pad, D), compute_dtype)
        zp = zp.at[:batch_size].set(z_hat[:batch_size])
        zp = zp.at[b_pad:b_pad + batch_size].set(z_hat[batch_size:])

    kernel = functools.partial(_nt_xent_kernel, b=batch_size, b_pad=b_pad,
                               inv_temp=float(1.0 / temperature))

    col_kwargs = {}
    if col_buffers is not None:
        # Deeper column-stream pipelining; worth enabling on v5e (~820 GB/s HBM).
        col_kwargs["pipeline_mode"] = pl.Buffered(col_buffers)

    itemsize = compute_dtype.itemsize
    per_row = pl.pallas_call(
        kernel,
        out_shape=jax.ShapeDtypeStruct((n_pad, 1), jnp.float32),
        grid_spec=pltpu.PrefetchScalarGridSpec(
            num_scalar_prefetch=0,
            grid=(nblk_rows, nblk_cols),
            in_specs=[
                # query row tile (resident across the column loop)
                pl.BlockSpec((tm_eff, D), lambda i, k: (i, 0)),
                # streamed column tile (double/triple buffered by Pallas)
                pl.BlockSpec((tk_eff, D), lambda i, k: (k, 0), **col_kwargs),
            ],
            out_specs=pl.BlockSpec((tm_eff, 1), lambda i, k: (i, 0)),
            scratch_shapes=[
                pltpu.VMEM((tm_eff, 1), jnp.float32),   # running max m
                pltpu.VMEM((tm_eff, 1), jnp.float32),   # running sum l
                pltpu.VMEM((tm_eff, 1), jnp.float32),   # positive logit
            ],
        ),
        compiler_params=pltpu.CompilerParams(
            dimension_semantics=("parallel", "arbitrary"),
            vmem_limit_bytes=48 * 1024 * 1024,          # v7x-safe (64 MiB / TC)
        ),
        cost_estimate=pl.CostEstimate(
            flops=2 * n_pad * n_pad * D,
            transcendentals=n_pad * n_pad + 4 * n_pad,
            bytes_accessed=(nblk_rows + 1) * n_pad * D * itemsize + n_pad * 4,
        ),
    )(zp, zp)

    # Final reduction over the valid (un-padded) rows; sum-CE divided by N.
    loss_sum = (jnp.sum(per_row[:batch_size, 0])
                + jnp.sum(per_row[b_pad:b_pad + batch_size, 0]))
    return loss_sum / N


def _nt_xent_ref(z, batch_size, temperature):
    # Pure-JAX reference mirroring the PyTorch module.
    z = z.astype(jnp.float32)
    N = 2 * batch_size
    dots = z @ z.T
    nrm = jnp.sqrt(jnp.sum(z * z, axis=-1, keepdims=True))
    sim = dots / jnp.maximum(nrm * nrm.T, 1e-8) / temperature
    diag = jnp.eye(N, dtype=bool)
    sim_m = jnp.where(diag, -jnp.inf, sim)
    lse = jax.scipy.special.logsumexp(sim_m, axis=-1)
    idx = jnp.arange(N)
    pair = jnp.where(idx < batch_size, idx + batch_size, idx - batch_size)
    pos = sim[idx, pair]
    return jnp.sum(lse - pos) / N


if __name__ == "__main__":
    temperature = 0.5
    key = jax.random.PRNGKey(0)
    k1, k2 = jax.random.split(key)

    # Case 1: aligned batch, single column step, f32 MXU path (tight check).
    B1, D1 = 8, 32
    z1 = jax.random.normal(k1, (2 * B1, D1), dtype=jnp.float32)
    out1 = jax.block_until_ready(
        nt_xent_loss(z1, B1, temperature, compute_dtype=jnp.float32))
    ref1 = _nt_xent_ref(z1, B1, temperature)
    assert jnp.allclose(out1, ref1, rtol=1e-4, atol=1e-4), (out1, ref1)

    # Case 2: unaligned batch + tiny tiles: exercises per-half padding, the
    # gated diagonal/padded-column masks, in-tile positive extraction at
    # different column steps and the multi-step online logsumexp (f32, tight).
    B2, D2 = 12, 32
    z2 = jax.random.normal(k2, (2 * B2, D2), dtype=jnp.float32)
    out2 = jax.block_until_ready(
        nt_xent_loss(z2, B2, temperature, tm=8, tk=8,
                     compute_dtype=jnp.float32))
    ref2 = _nt_xent_ref(z2, B2, temperature)
    assert jnp.allclose(out2, ref2, rtol=1e-4, atol=1e-4), (out2, ref2)

    # Case 3: default fast path (bf16 operands on the MXU, f32 accumulate).
    out3 = jax.block_until_ready(nt_xent_loss(z2, B2, temperature, tm=8, tk=8))
    assert jnp.allclose(out3, ref2, rtol=2e-2, atol=2e-2), (out3, ref2)

    print("KERNEL_OK")
</pallas_src>

<mosaic_0001>
module attributes {stable_mosaic.version = 11 : i64} {
  func.func @_nt_xent_kernel(%arg0: i32, %arg1: i32, %arg2: memref<8x32xf32, #tpu.memory_space<vmem>>, %arg3: memref<16x32xf32, #tpu.memory_space<vmem>>, %arg4: memref<8x1xf32, #tpu.memory_space<vmem>>, %arg5: memref<8x1xf32, #tpu.memory_space<vmem>>, %arg6: memref<8x1xf32, #tpu.memory_space<vmem>>, %arg7: memref<8x1xf32, #tpu.memory_space<vmem>>) attributes {dimension_semantics = [#tpu.dimension_semantics<parallel>, #tpu.dimension_semantics<arbitrary>], iteration_bounds = array<i64: 2, 1>, scalar_prefetch = 0 : i64, scratch_operands = 3 : i64, tpu.core_type = #tpu.core_type<tc>, window_params = [{transform_indices = @transform_0, window_bounds = array<i64: 8, 32>}, {transform_indices = @transform_1, window_bounds = array<i64: 16, 32>}, {transform_indices = @transform_2, window_bounds = array<i64: 8, 1>}]} {
    %c8_i32 = arith.constant 8 : i32
    %0 = arith.muli %arg0, %c8_i32 : i32
    %c16_i32 = arith.constant 16 : i32
    %1 = arith.muli %arg1, %c16_i32 : i32
    %c0_i32 = arith.constant 0 : i32
    %2 = arith.cmpi eq, %arg1, %c0_i32 : i32
    %3 = arith.extui %2 : i1 to i32
    %c0_i32_0 = arith.constant 0 : i32
    %4 = arith.cmpi ne, %3, %c0_i32_0 : i32
    scf.if %4 {
      %cst_16 = arith.constant -1.000000e+30 : f32
      %33 = vector.broadcast %cst_16 : f32 to vector<8x1xf32>
      %c0_17 = arith.constant 0 : index
      %c0_18 = arith.constant 0 : index
      %34 = vector.load %arg5[%c0_17, %c0_18] : memref<8x1xf32, #tpu.memory_space<vmem>>, vector<8x1xf32>
      tpu.vector_store %arg5[%c0_17, %c0_18], %33 {strides = array<i32>} : memref<8x1xf32, #tpu.memory_space<vmem>>, vector<8x1xf32>,
      %cst_19 = arith.constant 0.000000e+00 : f32
      %35 = vector.broadcast %cst_19 : f32 to vector<8x1xf32>
      %c0_20 = arith.constant 0 : index
      %c0_21 = arith.constant 0 : index
      %36 = vector.load %arg6[%c0_20, %c0_21] : memref<8x1xf32, #tpu.memory_space<vmem>>, vector<8x1xf32>
      tpu.vector_store %arg6[%c0_20, %c0_21], %35 {strides = array<i32>} : memref<8x1xf32, #tpu.memory_space<vmem>>, vector<8x1xf32>,
    } else {
    }
    %c0 = arith.constant 0 : index
    %c0_1 = arith.constant 0 : index
    %5 = vector.load %arg2[%c0, %c0_1] : memref<8x32xf32, #tpu.memory_space<vmem>>, vector<8x32xf32>
    %cst = arith.constant 2.000000e+00 : f32
    %6 = vector.broadcast %cst : f32 to vector<8x32xf32>
    %7 = arith.mulf %5, %6 : vector<8x32xf32>
    %c0_2 = arith.constant 0 : index
    %c0_3 = arith.constant 0 : index
    %8 = vector.load %arg3[%c0_2, %c0_3] : memref<16x32xf32, #tpu.memory_space<vmem>>, vector<16x32xf32>
    %cst_4 = arith.constant dense<0.000000e+00> : vector<8x16xf32>
    %9 = tpu.matmul %7, %8, %cst_4 {dimension_numbers = #tpu.dot_dimension_numbers<[1], [1], [0], [0], [0, 0, 1, 0], [], []>} : vector<8x32xf32>, vector<16x32xf32>, vector<8x16xf32> -> vector<8x16xf32>
    %c8_i32_5 = arith.constant 8 : i32
    %10 = arith.cmpi sge, %0, %c8_i32_5 : i32
    %c8_i32_6 = arith.constant 8 : i32
    %11 = arith.subi %0, %c8_i32_6 : i32
    %c8_i32_7 = arith.constant 8 : i32
    %12 = arith.addi %0, %c8_i32_7 : i32
    %13 = arith.select %10, %11, %12 : i32
    %14 = arith.cmpi sle, %1, %13 : i32
    %c16_i32_8 = arith.constant 16 : i32
    %15 = arith.addi %1, %c16_i32_8 : i32
    %16 = arith.cmpi slt, %13, %15 : i32
    %17 = arith.andi %14, %16 : i1
    %18 = arith.extui %17 : i1 to i32
    %c0_i32_9 = arith.constant 0 : i32
    %19 = arith.cmpi ne, %18, %c0_i32_9 : i32
    scf.if %19 {
      %33 = arith.subi %13, %1 : i32
      %34 = tpu.iota {dimensions = array<i32: 0>} : vector<8x16xi32>
      %35 = tpu.iota {dimensions = array<i32: 1>} : vector<8x16xi32>
      %36 = arith.subi %35, %34 : vector<8x16xi32>
      %37 = vector.broadcast %33 : i32 to vector<8x16xi32>
      %38 = arith.cmpi eq, %36, %37 : vector<8x16xi32>
      %cst_16 = arith.constant 0.000000e+00 : f32
      %39 = vector.broadcast %cst_16 : f32 to vector<8x16xf32>
      %40 = arith.select %38, %9, %39 : vector<8x16xi1>, vector<8x16xf32>
      %cst_17 = arith.constant dense<0.000000e+00> : vector<8xf32>
      %41 = vector.multi_reduction <add>, %40, %cst_17 [1] : vector<8x16xf32> to vector<8xf32>
      %42 = vector.shape_cast %41 : vector<8xf32> to vector<8x1xf32>
      %c0_18 = arith.constant 0 : index
      %c0_19 = arith.constant 0 : index
      %43 = vector.load %arg7[%c0_18, %c0_19] : memref<8x1xf32, #tpu.memory_space<vmem>>, vector<8x1xf32>
      tpu.vector_store %arg7[%c0_18, %c0_19], %42 {strides = array<i32>} : memref<8x1xf32, #tpu.memory_space<vmem>>, vector<8x1xf32>,
    } else {
    }
    %c16_i32_10 = arith.constant 16 : i32
    %20 = arith.addi %1, %c16_i32_10 : i32
    %21 = arith.cmpi slt, %0, %20 : i32
    %c8_i32_11 = arith.constant 8 : i32
    %22 = arith.addi %0, %c8_i32_11 : i32
    %23 = arith.cmpi slt, %1, %22 : i32
    %24 = arith.andi %21, %23 : i1
    %25 = arith.extui %24 : i1 to i32
    %c0_i32_12 = arith.constant 0 : i32
    %26 = arith.cmpi ne, %25, %c0_i32_12 : i32
    scf.if %26 {
      %33 = tpu.iota {dimensions = array<i32: 0>} : vector<8x16xi32>
      %34 = vector.broadcast %0 : i32 to vector<8x16xi32>
      %35 = arith.addi %34, %33 : vector<8x16xi32>
      %36 = tpu.iota {dimensions = array<i32: 1>} : vector<8x16xi32>
      %37 = vector.broadcast %1 : i32 to vector<8x16xi32>
      %38 = arith.addi %37, %36 : vector<8x16xi32>
      %39 = arith.cmpi eq, %35, %38 : vector<8x16xi32>
      %cst_16 = arith.constant -1.000000e+30 : f32
      %40 = vector.broadcast %cst_16 : f32 to vector<8x16xf32>
      %41 = arith.select %39, %40, %9 : vector<8x16xi1>, vector<8x16xf32>
      %c0_17 = arith.constant 0 : index
      %c0_18 = arith.constant 0 : index
      %42 = vector.load %arg5[%c0_17, %c0_18] : memref<8x1xf32, #tpu.memory_space<vmem>>, vector<8x1xf32>
      %cst_19 = arith.constant dense<0xFF800000> : vector<8xf32>
      %43 = vector.multi_reduction <maximumf>, %41, %cst_19 [1] : vector<8x16xf32> to vector<8xf32>
      %44 = vector.shape_cast %43 : vector<8xf32> to vector<8x1xf32>
      %45 = arith.maximumf %42, %44 : vector<8x1xf32>
      %46 = arith.subf %42, %45 : vector<8x1xf32>
      %47 = math.exp %46 : vector<8x1xf32>
      %c0_20 = arith.constant 0 : index
      %c0_21 = arith.constant 0 : index
      %48 = vector.load %arg6[%c0_20, %c0_21] : memref<8x1xf32, #tpu.memory_space<vmem>>, vector<8x1xf32>
      %49 = arith.mulf %47, %48 : vector<8x1xf32>
      %50 = vector.broadcast %45 : vector<8x1xf32> to vector<8x16xf32>
      %51 = arith.subf %41, %50 : vector<8x16xf32>
      %52 = math.exp %51 : vector<8x16xf32>
      %cst_22 = arith.constant dense<0.000000e+00> : vector<8xf32>
      %53 = vector.multi_reduction <add>, %52, %cst_22 [1] : vector<8x16xf32> to vector<8xf32>
      %54 = vector.shape_cast %53 : vector<8xf32> to vector<8x1xf32>
      %55 = arith.addf %49, %54 : vector<8x1xf32>
      %c0_23 = arith.constant 0 : index
      %c0_24 = arith.constant 0 : index
      %56 = vector.load %arg6[%c0_23, %c0_24] : memref<8x1xf32, #tpu.memory_space<vmem>>, vector<8x1xf32>
      tpu.vector_store %arg6[%c0_23, %c0_24], %55 {strides = array<i32>} : memref<8x1xf32, #tpu.memory_space<vmem>>, vector<8x1xf32>,
      %c0_25 = arith.constant 0 : index
      %c0_26 = arith.constant 0 : index
      %57 = vector.load %arg5[%c0_25, %c0_26] : memref<8x1xf32, #tpu.memory_space<vmem>>, vector<8x1xf32>
      tpu.vector_store %arg5[%c0_25, %c0_26], %45 {strides = array<i32>} : memref<8x1xf32, #tpu.memory_space<vmem>>, vector<8x1xf32>,
    } else {
    }
    %true = arith.constant true
    %27 = arith.xori %24, %true : i1
    %28 = arith.extui %27 : i1 to i32
    %c0_i32_13 = arith.constant 0 : i32
    %29 = arith.cmpi ne, %28, %c0_i32_13 : i32
    scf.if %29 {
      %c0_16 = arith.constant 0 : index
      %c0_17 = arith.constant 0 : index
      %33 = vector.load %arg5[%c0_16, %c0_17] : memref<8x1xf32, #tpu.memory_space<vmem>>, vector<8x1xf32>
      %cst_18 = arith.constant dense<0xFF800000> : vector<8xf32>
      %34 = vector.multi_reduction <maximumf>, %9, %cst_18 [1] : vector<8x16xf32> to vector<8xf32>
      %35 = vector.shape_cast %34 : vector<8xf32> to vector<8x1xf32>
      %36 = arith.maximumf %33, %35 : vector<8x1xf32>
      %37 = arith.subf %33, %36 : vector<8x1xf32>
      %38 = math.exp %37 : vector<8x1xf32>
      %c0_19 = arith.constant 0 : index
      %c0_20 = arith.constant 0 : index
      %39 = vector.load %arg6[%c0_19, %c0_20] : memref<8x1xf32, #tpu.memory_space<vmem>>, vector<8x1xf32>
      %40 = arith.mulf %38, %39 : vector<8x1xf32>
      %41 = vector.broadcast %36 : vector<8x1xf32> to vector<8x16xf32>
      %42 = arith.subf %9, %41 : vector<8x16xf32>
      %43 = math.exp %42 : vector<8x16xf32>
      %cst_21 = arith.constant dense<0.000000e+00> : vector<8xf32>
      %44 = vector.multi_reduction <add>, %43, %cst_21 [1] : vector<8x16xf32> to vector<8xf32>
      %45 = vector.shape_cast %44 : vector<8xf32> to vector<8x1xf32>
      %46 = arith.addf %40, %45 : vector<8x1xf32>
      %c0_22 = arith.constant 0 : index
      %c0_23 = arith.constant 0 : index
      %47 = vector.load %arg6[%c0_22, %c0_23] : memref<8x1xf32, #tpu.memory_space<vmem>>, vector<8x1xf32>
      tpu.vector_store %arg6[%c0_22, %c0_23], %46 {strides = array<i32>} : memref<8x1xf32, #tpu.memory_space<vmem>>, vector<8x1xf32>,
      %c0_24 = arith.constant 0 : index
      %c0_25 = arith.constant 0 : index
      %48 = vector.load %arg5[%c0_24, %c0_25] : memref<8x1xf32, #tpu.memory_space<vmem>>, vector<8x1xf32>
      tpu.vector_store %arg5[%c0_24, %c0_25], %36 {strides = array<i32>} : memref<8x1xf32, #tpu.memory_space<vmem>>, vector<8x1xf32>,
    } else {
    }
    %c0_i32_14 = arith.constant 0 : i32
    %30 = arith.cmpi eq, %arg1, %c0_i32_14 : i32
    %31 = arith.extui %30 : i1 to i32
    %c0_i32_15 = arith.constant 0 : i32
    %32 = arith.cmpi ne, %31, %c0_i32_15 : i32
    scf.if %32 {
      %c0_16 = arith.constant 0 : index
      %c0_17 = arith.constant 0 : index
      %33 = vector.load %arg5[%c0_16, %c0_17] : memref<8x1xf32, #tpu.memory_space<vmem>>, vector<8x1xf32>
      %c0_18 = arith.constant 0 : index
      %c0_19 = arith.constant 0 : index
      %34 = vector.load %arg6[%c0_18, %c0_19] : memref<8x1xf32, #tpu.memory_space<vmem>>, vector<8x1xf32>
      %35 = math.log %34 : vector<8x1xf32>
      %36 = arith.addf %33, %35 : vector<8x1xf32>
      %c0_20 = arith.constant 0 : index
      %c0_21 = arith.constant 0 : index
      %37 = vector.load %arg7[%c0_20, %c0_21] : memref<8x1xf32, #tpu.memory_space<vmem>>, vector<8x1xf32>
      %38 = arith.subf %36, %37 : vector<8x1xf32>
      %c0_22 = arith.constant 0 : index
      %c0_23 = arith.constant 0 : index
      %39 = vector.load %arg4[%c0_22, %c0_23] : memref<8x1xf32, #tpu.memory_space<vmem>>, vector<8x1xf32>
      tpu.vector_store %arg4[%c0_22, %c0_23], %38 {strides = array<i32>} : memref<8x1xf32, #tpu.memory_space<vmem>>, vector<8x1xf32>,
    } else {
    }
    return
  }
  func.func @transform_0(%arg0: i32, %arg1: i32) -> (i32, i32) {
    %c0_i32 = arith.constant 0 : i32
    %c0_i32_0 = arith.constant 0 : i32
    return %arg0, %c0_i32 : i32, i32
  }
  func.func @transform_1(%arg0: i32, %arg1: i32) -> (i32, i32) {
    %c0_i32 = arith.constant 0 : i32
    %c0_i32_0 = arith.constant 0 : i32
    return %arg1, %c0_i32 : i32, i32
  }
  func.func @transform_2(%arg0: i32, %arg1: i32) -> (i32, i32) {
    %c0_i32 = arith.constant 0 : i32
    %c0_i32_0 = arith.constant 0 : i32
    return %arg0, %c0_i32 : i32, i32
  }
}

</mosaic_0001>

<llo_original>
// kernel: tpu_custom_call.1
$region0: #{tpu_custom_call.1}
  #allocation0 [shape = 'u32[]', space=smem, size = 0x4, offset = 0x4, fixed_abs, tag = 'smem constant byte address 0x4 - core index']
  #allocation1 [shape = 'u32[72,128]{1,0:T(1,128)}', space=vmem, size = 0x9000, scoped, tag = 'internal scratch']
  #allocation2 [shape = 'f32[8,1]{1,0:T(8,128)}', space=vmem, size = 0x1000, scoped, tag = 'scratch operand']
  #allocation3 [shape = 'f32[8,1]{1,0:T(8,128)}', space=vmem, size = 0x1000, scoped, tag = 'scratch operand']
  #allocation4 [shape = 'f32[8,1]{1,0:T(8,128)}', space=vmem, size = 0x1000, scoped, tag = 'scratch operand']
  %s0 = inlined_call_operand.hbm [shape: f32[16,32], index: 0, kind: input, shape index: {}]
  %s1 = inlined_call_operand.hbm [shape: f32[16,32], index: 1, kind: input, shape index: {}]
  %s2 = inlined_call_operand.vmem [shape: f32[16,1], index: 2, kind: output, shape index: {}]
  %s3 = sld [smem:[#allocation0]]
  $region69: #{tpu_custom_call.1} parent=0
    _
  %s5 = ssub.s32 1, %s3
  %s6 = scalar_select 0, %s5, %s3
  $region1: #{tpu_custom_call.1} parent=0
    #allocation5 [shape = 'u8[8192]{0}', space=vmem, size = 0x2000, scoped, tag = 'input window, operand 0']
    #allocation6 [shape = 's32[2]{0}', space=sflag, size = 0x8, scoped, tag = 'scoped memory for tpu_custom_call.1']
    #allocation7 [shape = 'u8[8192]{0}', space=vmem, size = 0x2000, scoped, tag = 'input window, operand 1, single buffered']
    #allocation8 [shape = 's32[1]{0}', space=sflag, size = 0x4, scoped, tag = 'scoped memory for tpu_custom_call.1']
    %7 = vsyncpa [#allocation6], 0
    %s8 = scalar_lea.sflag [#allocation6], 1
    %9 = vsyncpa %s8, 0
    %10 = vsyncpa [#allocation8], 0
    loop: start=0, step=1, limit=4
    $region2: #{tpu_custom_call.1} parent=1 // loop_pre_header
      _
    $region3: #{tpu_custom_call.1} parent=1 // loop_header
      %s12 = sphi 0, %s16
      %p13 = scmp.ge.s32.totalorder %s12, 4
      %s19 = sphi 0, %s31
      %s20 = sphi 0, %s27
      %s21 = sphi 0, %s19
      %s22 = sphi 0, %s20
      %s23 = sphi 0, %s21
      %s24 = sphi 0, %s22
      %s34 = sphi 0, %s36
      %s37 = sphi 0, %s34
      %s38 = sphi 0, %s37
      %s54 = sphi 0, %s38
      %s60 = sphi 0, %s62
      %s63 = sphi 0, %s60
      %s64 = sphi 0, %s63
      %s80 = sphi 0, %s64
      %s86 = sphi 0, %s88
      %s89 = sphi 0, %s86
      %s90 = sphi 0, %s89
      %s106 = sphi 0, %s90
    $region4: #{tpu_custom_call.1} parent=1 // loop_header_branch
      %15 = sbr.rel (%p13) target = $region8
    $region5: #{tpu_custom_call.1} parent=1 // loop_body
      %s17 = ssub.s32 %s12, 1
      %s18 = ssub.s32 %s12, 2
      %s25 = sadd.s32 1, %s20
      %p26 = scmp.ge.s32.totalorder %s25, 1
      %s27 = scalar_select %p26, 0, %s25
      %s28 = sadd.s32 1, %s19
      %s29 = scalar_select %p26, %s28, %s19
      %p30 = scmp.ge.s32.totalorder %s29, 2
      %s31 = scalar_select %p30, 0, %s29
      %s32 = ssub.s32 %s19, %s31
      %p33 = scmp.eq.s32.totalorder %s32, 0
      %s35 = sadd.s32 %s34, 1
      %s36 = scalar_select %p33, %s34, %s35
      %p39 = pneg %p33
      %p40 = scmp.eq.s32.totalorder %s12, 1
      %p41 = por %p39, %p40
      %p42 = scmp.ne.s32.totalorder %s34, %s37
      %p43 = scmp.eq.s32.totalorder %s12, 0
      %p44 = por %p42, %p43
      %p45 = scmp.ne.s32.totalorder %s34, %s37
      %p46 = scmp.eq.s32.totalorder %s17, 1
      %p47 = por %p45, %p46
      %p48 = scmp.ne.s32.totalorder %s37, %s38
      %p49 = scmp.eq.s32.totalorder %s17, 0
      %p50 = por %p48, %p49
      %p51 = scmp.ne.s32.totalorder %s37, %s38
      %p52 = scmp.eq.s32.totalorder %s18, 1
      %p53 = por %p51, %p52
      %p55 = scmp.ne.s32.totalorder %s38, %s54
      %p56 = scmp.eq.s32.totalorder %s18, 0
      %p57 = por %p55, %p56
      %s58 = ssub.s32 %s20, %s27
      %p59 = scmp.eq.s32.totalorder %s58, 0
      %s61 = sadd.s32 %s60, 1
      %s62 = scalar_select %p59, %s60, %s61
      %p65 = pneg %p59
      %p66 = scmp.eq.s32.totalorder %s12, 1
      %p67 = por %p65, %p66
      %p68 = scmp.ne.s32.totalorder %s60, %s63
      %p69 = scmp.eq.s32.totalorder %s12, 0
      %p70 = por %p68, %p69
      %p71 = scmp.ne.s32.totalorder %s60, %s63
      %p72 = scmp.eq.s32.totalorder %s17, 1
      %p73 = por %p71, %p72
      %p74 = scmp.ne.s32.totalorder %s63, %s64
      %p75 = scmp.eq.s32.totalorder %s17, 0
      %p76 = por %p74, %p75
      %p77 = scmp.ne.s32.totalorder %s63, %s64
      %p78 = scmp.eq.s32.totalorder %s18, 1
      %p79 = por %p77, %p78
      %p81 = scmp.ne.s32.totalorder %s64, %s80
      %p82 = scmp.eq.s32.totalorder %s18, 0
      %p83 = por %p81, %p82
      %s84 = ssub.s32 %s19, %s31
      %p85 = scmp.eq.s32.totalorder %s84, 0
      %s87 = sadd.s32 %s86, 1
      %s88 = scalar_select %p85, %s86, %s87
      %p91 = pneg %p85
      %p92 = scmp.eq.s32.totalorder %s12, 1
      %p93 = por %p91, %p92
      %p94 = scmp.ne.s32.totalorder %s86, %s89
      %p95 = scmp.eq.s32.totalorder %s12, 0
      %p96 = por %p94, %p95
      %p97 = scmp.ne.s32.totalorder %s86, %s89
      %p98 = scmp.eq.s32.totalorder %s17, 1
      %p99 = por %p97, %p98
      %p100 = scmp.ne.s32.totalorder %s89, %s90
      %p101 = scmp.eq.s32.totalorder %s17, 0
      %p102 = por %p100, %p101
      %p103 = scmp.ne.s32.totalorder %s89, %s90
      %p104 = scmp.eq.s32.totalorder %s18, 1
      %p105 = por %p103, %p104
      %p107 = scmp.ne.s32.totalorder %s90, %s106
      %p108 = scmp.eq.s32.totalorder %s18, 0
      %p109 = por %p107, %p108
      %p110 = scmp.le.s32.totalorder 1, %s12
      %p111 = scmp.lt.s32.totalorder %s12, 3
      %p112 = pnand %p110, %p111
      %p113 = pneg %p112
      // Predicated region
      $region9: #{tpu_custom_call.1} parent=5 // pred_check
        _
      $region10: #{tpu_custom_call.1} parent=5 // pred_check_branch
        %115 = sbr.rel (%p112) target = $region12
      $region11: #{tpu_custom_call.1} parent=5 // pred_region
        %s116 = ssub.s32 %s12, 1
        // Predicated region
        $region13: #{tpu_custom_call.1} parent=11 // pred_check
          %p117 = pneg %p76
        $region14: #{tpu_custom_call.1} parent=11 // pred_check_branch
          %119 = sbr.rel (%p117) target = $region16
        $region15: #{tpu_custom_call.1} parent=11 // pred_region
          %s120 = smul.u32 2, %s22
          %122 = vsyncadd [#allocation8], 0
          %s123 = smul.addr %s120, 8
          %s124 = scalar_lea.hbm %s1, %s123
          %s125 = sshll.u32 %s124, 4
          %s126 = int_to_ptr.hbm [resolvable:$true] %s125
          %s127 = sshll.u32 [#allocation7], 4
          %s128 = int_to_ptr.vmem [resolvable:$true] %s127
          %133 = dma.hbm_to_vmem [thread:$0]  %s126, 256, %s128, [#allocation8], 128, 128, 8
        $region16: #{tpu_custom_call.1} parent=11 // pred_fallthru
          _
      $region12: #{tpu_custom_call.1} parent=5 // pred_fallthru
        _
      %p134 = scmp.lt.s32.totalorder %s12, 2
      // Predicated region
      $region17: #{tpu_custom_call.1} parent=5 // pred_check
        %p135 = pneg %p134
      $region18: #{tpu_custom_call.1} parent=5 // pred_check_branch
        %137 = sbr.rel (%p135) target = $region20
      $region19: #{tpu_custom_call.1} parent=5 // pred_region
        // Predicated region
        $region21: #{tpu_custom_call.1} parent=19 // pred_check
          %p138 = pneg %p44
        $region22: #{tpu_custom_call.1} parent=19 // pred_check_branch
          %140 = sbr.rel (%p138) target = $region24
        $region23: #{tpu_custom_call.1} parent=19 // pred_region
          %s141 = sand.u32 %s34, 1
          %s142 = scalar_lea.sflag [#allocation6], %s141
          %s143 = sand.u32 %s34, 1
          %s144 = smul.addr %s143, 8
          %s145 = scalar_lea.vmem [#allocation5], %s144
          %147 = vsyncadd %s142, 0
          %s148 = smul.addr %s19, 8
          %s149 = scalar_lea.hbm %s0, %s148
          %s151 = sshll.u32 %s149, 4
          %s152 = int_to_ptr.hbm [resolvable:$true] %s151
          %s153 = sshll.u32 %s145, 4
          %s154 = int_to_ptr.vmem [resolvable:$true] %s153
          %156 = dma.hbm_to_vmem [thread:$0]  %s152, 128, %s154, %s142
        $region24: #{tpu_custom_call.1} parent=19 // pred_fallthru
          _
      $region20: #{tpu_custom_call.1} parent=5 // pred_fallthru
        _
      %p157 = scmp.le.s32.totalorder 1, %s12
      %p158 = scmp.lt.s32.totalorder %s12, 3
      %p159 = pnand %p157, %p158
      %p160 = pneg %p159
      // Predicated region
      $region25: #{tpu_custom_call.1} parent=5 // pred_check
        _
      $region26: #{tpu_custom_call.1} parent=5 // pred_check_branch
        %162 = sbr.rel (%p159) target = $region28
      $region27: #{tpu_custom_call.1} parent=5 // pred_region
        %s163 = ssub.s32 %s12, 1
        %s164 = sand.u32 %s37, 1
        %s165 = scalar_lea.sflag [#allocation6], %s164
        %s166 = sand.u32 %s37, 1
        %s167 = smul.addr %s166, 8
        %s168 = scalar_lea.vmem [#allocation5], %s167
        // Predicated region
        $region29: #{tpu_custom_call.1} parent=27 // pred_check
          %p169 = pneg %p50
        $region30: #{tpu_custom_call.1} parent=27 // pred_check_branch
          %171 = sbr.rel (%p169) target = $region32
        $region31: #{tpu_custom_call.1} parent=27 // pred_region
          %173 = dma.done %s165, 128
        $region32: #{tpu_custom_call.1} parent=27 // pred_fallthru
          _
        // Predicated region
        $region33: #{tpu_custom_call.1} parent=27 // pred_check
          %p174 = pneg %p76
        $region34: #{tpu_custom_call.1} parent=27 // pred_check_branch
          %176 = sbr.rel (%p174) target = $region36
        $region35: #{tpu_custom_call.1} parent=27 // pred_region
          %178 = dma.done [#allocation8], 256
        $region36: #{tpu_custom_call.1} parent=27 // pred_fallthru
          _
        %s179 = sand.u32 %s37, 1
        %s180 = scalar_lea.sflag [#allocation6], %s179
        %s181 = sand.u32 %s37, 1
        %s182 = smul.addr %s181, 8
        %s183 = scalar_lea.vmem [#allocation5], %s182
        %p184 = pneg %p50
        %p185 = pneg %p47
        %p186 = pneg %p76
        %p187 = pneg %p73
        %p188 = pneg %p102
        %p189 = pneg %p99
        %p190 = scmp.lt.s32.totalorder %s21, 1
        %s191 = scalar_select %p190, %s21, 1
        %s192 = smul.addr %s191, 8
        %s193 = scalar_lea.vmem %s2, %s192
        %s194 = smul.u32 2, %s22
        %p195 = scmp.lt.s32.totalorder %s21, 1
        %s196 = scalar_select %p195, %s21, 1
        %s197 = smul.addr %s196, 8
        %s198 = scalar_lea.vmem %s2, %s197
        %s199 = smul.u32 %s21, 8
        %s200 = smul.u32 %s22, 16
        %p201 = scmp.eq.s32.totalorder %s22, 0
        // Predicated region
        $region37: #{tpu_custom_call.1} parent=27 // pred_check
          %p202 = pneg %p201
        $region38: #{tpu_custom_call.1} parent=27 // pred_check_branch
          %204 = sbr.rel (%p202) target = $region40
        $region39: #{tpu_custom_call.1} parent=27 // pred_region
          %vm205 = vcmask 7168
          %206 = vst.msk [vmem:[#allocation2] sm:$0xff] %vm205, -1e+30
          %207 = vst.msk [vmem:[#allocation3] sm:$0xff] %vm205, 0.0
        $region40: #{tpu_custom_call.1} parent=27 // pred_fallthru
          _
        %v208 = vld [vmem:[%s168] sm:$0xff]
        %v209 = vmul.f32 %v208, 2.0
        %v210 = vld [vmem:[#allocation7] sm:$0xff]
        %v211 = vld [vmem:[#allocation7 + $0x8] sm:$0xff]
        %vm212 = vcmask 261120
        %v214 = vsel %vm212, %v209, 0
        %v217 = vsel %vm212, %v210, 0
        %v220 = vsel %vm212, %v211, 0
        %222 = vmatpush.xpose.msra.mxu0 0.0
        %223 = vmatpush.xpose.msra.mxu0 0.0
        %224 = vmatpush.xpose.msra.mxu0 0.0
        %225 = vmatpush.xpose.msra.mxu0 0.0
        %226 = vmatpush.xpose.msra.mxu0 0.0
        %227 = vmatpush.xpose.msra.mxu0 0.0
        %228 = vmatpush.xpose.msra.mxu0 0.0
        %229 = vmatpush.xpose.msra.mxu0 0.0
        %230 = vmatpush.xpose.msra.mxu0 0.0
        %231 = vmatpush.xpose.msra.mxu0 0.0
        %232 = vmatpush.xpose.msra.mxu0 0.0
        %233 = vmatpush.xpose.msra.mxu0 0.0
        %234 = vmatpush.xpose.msra.mxu0 0.0
        %235 = vmatpush.xpose.msra.mxu0 0.0
        %236 = vmatpush.xpose.msra.mxu0 %v220
        %237 = vmatpush.xpose.msra.mxu0 %v217
        %238 = vmatmul.f32.gmra.mxu0 %v214
        %v239 = vpop.f32.mrf.mxu0
        %v240 = vadd.f32 0.0, %v239
        %241 = vdwg.mxu0
        %p242 = scmp.ge.s32.totalorder %s199, 8
        %s243 = ssub.s32 %s199, 8
        %s244 = sadd.s32 %s199, 8
        %s245 = scalar_select %p242, %s243, %s244
        %p246 = scmp.le.s32.totalorder %s200, %s245
        %s247 = sadd.s32 %s200, 16
        %p248 = scmp.lt.s32.totalorder %s245, %s247
        %p249 = pnand %p246, %p248
        %p250 = pneg %p249
        // Predicated region
        $region41: #{tpu_custom_call.1} parent=27 // pred_check
          _
        $region42: #{tpu_custom_call.1} parent=27 // pred_check_branch
          %252 = sbr.rel (%p249) target = $region44
        $region43: #{tpu_custom_call.1} parent=27 // pred_region
          %s253 = ssub.s32 %s245, %s200
          %v254 = vlaneseq
          %v255 = vshrl.u32 %v254, 7
          %v256 = vlaneseq
          %v257 = vand.u32 %v256, 127
          %v258 = vsub.s32 %v257, %v255
          %v259 = vstv %s253
          %vm260 = vcmp.eq.s32.totalorder %v258, %v259
          %v261 = vsel %vm260, %v240, 0.0
          %vm262 = vcmask 130048
          %v263 = vsel %vm262, %v261, 0.0
          %264 = vadd.xlane.f32.xlu0 %v263
          %v265 = vpop.xlane.xlu0 %264
          %vm266 = vcmask 7168
          %267 = vst.msk [vmem:[#allocation4] sm:$0xff] %vm266, %v265
        $region44: #{tpu_custom_call.1} parent=27 // pred_fallthru
          _
        %p268 = scmp.lt.s32.totalorder %s199, %s247
        %p269 = scmp.lt.s32.totalorder %s200, %s244
        %p270 = pnand %p268, %p269
        %p271 = pneg %p270
        // Predicated region
        $region45: #{tpu_custom_call.1} parent=27 // pred_check
          _
        $region46: #{tpu_custom_call.1} parent=27 // pred_check_branch
          %273 = sbr.rel (%p270) target = $region48
        $region47: #{tpu_custom_call.1} parent=27 // pred_region
          %v274 = vlaneseq
          %v275 = vshrl.u32 %v274, 7
          %v276 = vstv %s199
          %v277 = vadd.s32 %v276, %v275
          %v278 = vlaneseq
          %v279 = vand.u32 %v278, 127
          %v280 = vstv %s200
          %v281 = vadd.s32 %v280, %v279
          %vm282 = vcmp.eq.s32.totalorder %v277, %v281
          %v283 = vsel %vm282, -1e+30, %v240
          %v284 = vld [vmem:[#allocation2] sm:$0xff]
          %vm285 = vcmask 130048
          %v286 = vsel %vm285, %v283, -inf
          %287 = vmax.xlane.f32.xlu0 %v286
          %v288 = vpop.xlane.xlu0 %287
          %v289 = vmax.f32 %v284, %v288
          %v290 = vsub.f32 %v284, %v289
          %v291 = vmul.f32 %v290, 1.442695
          %v292 = vpow.pop %v291
          %v293 = vld [vmem:[#allocation3] sm:$0xff]
          %v294 = vmul.f32 %v292, %v293
          %296 = vset.pattern.permute.xlu0 0
          %297 = vperm.xlu0 %296, %v289
          %v298 = vpop.permute.xlu0 %297
          %v300 = vsub.f32 %v283, %v298
          %v301 = vmul.f32 %v300, 1.442695
          %v302 = vpow.pop %v301
          %v303 = vsel %vm285, %v302, 0.0
          %304 = vadd.xlane.f32.xlu0 %v303
          %v305 = vpop.xlane.xlu0 %304
          %v306 = vadd.f32 %v294, %v305
          %vm307 = vcmask 7168
          %308 = vst.msk [vmem:[#allocation3] sm:$0xff] %vm307, %v306
          %309 = vst.msk [vmem:[#allocation2] sm:$0xff] %vm307, %v289
        $region48: #{tpu_custom_call.1} parent=27 // pred_fallthru
          _
        %p310 = pneg %p271
        // Predicated region
        $region49: #{tpu_custom_call.1} parent=27 // pred_check
          _
        $region50: #{tpu_custom_call.1} parent=27 // pred_check_branch
          %312 = sbr.rel (%p271) target = $region52
        $region51: #{tpu_custom_call.1} parent=27 // pred_region
          %v313 = vld [vmem:[#allocation2] sm:$0xff]
          %vm314 = vcmask 130048
          %v315 = vsel %vm314, %v240, -inf
          %316 = vmax.xlane.f32.xlu0 %v315
          %v317 = vpop.xlane.xlu0 %316
          %v318 = vmax.f32 %v313, %v317
          %v319 = vsub.f32 %v313, %v318
          %v320 = vmul.f32 %v319, 1.442695
          %v321 = vpow.pop %v320
          %v322 = vld [vmem:[#allocation3] sm:$0xff]
          %v323 = vmul.f32 %v321, %v322
          %325 = vset.pattern.permute.xlu0 0
          %326 = vperm.xlu0 %325, %v318
          %v327 = vpop.permute.xlu0 %326
          %v329 = vsub.f32 %v240, %v327
          %v330 = vmul.f32 %v329, 1.442695
          %v331 = vpow.pop %v330
          %v332 = vsel %vm314, %v331, 0.0
          %333 = vadd.xlane.f32.xlu0 %v332
          %v334 = vpop.xlane.xlu0 %333
          %v335 = vadd.f32 %v323, %v334
          %vm336 = vcmask 7168
          %337 = vst.msk [vmem:[#allocation3] sm:$0xff] %vm336, %v335
          %338 = vst.msk [vmem:[#allocation2] sm:$0xff] %vm336, %v318
        $region52: #{tpu_custom_call.1} parent=27 // pred_fallthru
          _
        // Predicated region
        $region53: #{tpu_custom_call.1} parent=27 // pred_check
          %p339 = pneg %p201
        $region54: #{tpu_custom_call.1} parent=27 // pred_check_branch
          %341 = sbr.rel (%p339) target = $region56
        $region55: #{tpu_custom_call.1} parent=27 // pred_region
          %v342 = vld [vmem:[#allocation2] sm:$0xff]
          %v343 = vld [vmem:[#allocation3] sm:$0xff]
          %v344 = vlog2.pop %v343
          %v345 = vmul.f32 %v344, 0.6931472
          %v346 = vadd.f32 %v342, %v345
          %v347 = vld [vmem:[#allocation4] sm:$0xff]
          %v348 = vsub.f32 %v346, %v347
          %vm349 = vcmask 7168
          %350 = vst.msk [vmem:[%s198] sm:$0xff] %vm349, %v348
        $region56: #{tpu_custom_call.1} parent=27 // pred_fallthru
          _
        %p351 = scmp.lt.s32.totalorder %s21, 1
        %s352 = scalar_select %p351, %s21, 1
        %s353 = smul.addr %s352, 8
        %s354 = scalar_lea.vmem %s2, %s353
        // Predicated region
        $region57: #{tpu_custom_call.1} parent=27 // pred_check
          %p355 = pneg %p99
        $region58: #{tpu_custom_call.1} parent=27 // pred_check_branch
          %357 = sbr.rel (%p355) target = $region60
        $region59: #{tpu_custom_call.1} parent=27 // pred_region
          _
        $region60: #{tpu_custom_call.1} parent=27 // pred_fallthru
          _
      $region28: #{tpu_custom_call.1} parent=5 // pred_fallthru
        _
      %p358 = scmp.le.s32.totalorder 2, %s12
      // Predicated region
      $region61: #{tpu_custom_call.1} parent=5 // pred_check
        %p359 = pneg %p358
      $region62: #{tpu_custom_call.1} parent=5 // pred_check_branch
        %361 = sbr.rel (%p359) target = $region64
      $region63: #{tpu_custom_call.1} parent=5 // pred_region
        %s362 = ssub.s32 %s12, 2
        // Predicated region
        $region65: #{tpu_custom_call.1} parent=63 // pred_check
          %p363 = pneg %p105
        $region66: #{tpu_custom_call.1} parent=63 // pred_check_branch
          %365 = sbr.rel (%p363) target = $region68
        $region67: #{tpu_custom_call.1} parent=63 // pred_region
          %p366 = scmp.lt.s32.totalorder %s23, 1
          %s367 = scalar_select %p366, %s23, 1
          %s368 = smul.addr %s367, 8
          %s369 = scalar_lea.vmem %s2, %s368
        $region68: #{tpu_custom_call.1} parent=63 // pred_fallthru
          _
      $region64: #{tpu_custom_call.1} parent=5 // pred_fallthru
        _
    $region6: #{tpu_custom_call.1} parent=1 // loop_footer
      %s16 = sadd.s32 1, %s12
    $region7: #{tpu_custom_call.1} parent=1 // loop_footer_branch
      %11 = sbr.rel target = $region3
    $region8: #{tpu_custom_call.1} parent=1 // loop_exit
      _
    %370 = vsyncpa [#allocation6], 1
    %s371 = scalar_lea.sflag [#allocation6], 1
    %372 = vsyncpa %s371, 1
    %373 = vsyncpa [#allocation8], 1

</llo_original>
